<compile_context>
chip_gen: v5e
topology: v5e:2x2
jax: 0.10.0
libtpu: 0.0.40
codegen_flags: <defaults>
</compile_context>

<pallas_src>
import functools

import jax
import jax.numpy as jnp
from jax.experimental import pallas as pl
from jax.experimental.pallas import tpu as pltpu

EMBED_DIM = 32
NUM_HEADS = 4
FFN_DIM = 64
SEQ_LEN = 8
BATCH = 2
LN_EPS = 1e-5
NEG_BIG = -1e30  # finite additive key-padding bias (exp() underflows to exactly 0 in f32)

# Matmul-operand dtype. float32 matches the PyTorch module (1e-4 tolerance).
# Set to jnp.bfloat16 on v6e/v7x to feed the MXU its native dtype (f32 accumulation kept).
MATMUL_DTYPE = jnp.float32


def _mm(a, b):
    """Matmul with f32 accumulation; operands cast to MATMUL_DTYPE (no-op for f32)."""
    return jnp.dot(a.astype(MATMUL_DTYPE), b.astype(MATMUL_DTYPE),
                   preferred_element_type=jnp.float32)


def _layer_norm(x, gamma, beta):
    mu = jnp.mean(x, axis=-1, keepdims=True)
    var = jnp.mean(jnp.square(x - mu), axis=-1, keepdims=True)
    return (x - mu) * jax.lax.rsqrt(var + LN_EPS) * gamma + beta


def encoder_layer_kernel(x_ref, bias_ref, wa_ref, w2_ref, p_ref, out_ref, *, num_heads):
    # x_ref    : (BB, S, D) f32 batch block
    # bias_ref : (BB, S)    f32 additive key-padding bias (0 or NEG_BIG)
    # wa_ref   : (D, 3D + D + F) = [Wqkv | Wo | W1]   (all transposed to (in, out))
    # w2_ref   : (F, D)           = W2 transposed
    # p_ref    : (8, max(3D, F)) rows: bqkv, bo, ln1_g, ln1_b, b1, b2, ln2_g, ln2_b
    BB, S, D = x_ref.shape
    H = num_heads
    hd = D // H
    F = w2_ref.shape[0]
    D3 = 3 * D
    scaling = float(hd) ** -0.5

    x = x_ref[...].reshape(BB * S, D)            # merge leading dims only (lane dim unchanged)
    wa = wa_ref[...]
    p = p_ref[...]

    # ---- fused QKV projection: ONE (BB*S, D) @ (D, 3D) matmul ----
    qkv = _mm(x, wa[:, 0:D3]) + p[0:1, 0:D3]
    q = qkv[:, 0:D] * scaling                    # fairseq scales q after in_proj (incl. bias)
    k = qkv[:, D:2 * D]
    v = qkv[:, 2 * D:D3]

    q3 = q.reshape(BB, S, D)
    k3 = k.reshape(BB, S, D)
    v3 = v.reshape(BB, S, D)

    # ---- stack heads into a leading batch dim -> one batched contraction, one softmax ----
    def heads(t3):                               # (BB, S, D) -> (H*BB, S, hd), n = h*BB + b
        return jnp.concatenate(
            [t3[:, :, h * hd:(h + 1) * hd] for h in range(H)], axis=0)

    qh, kh, vh = heads(q3), heads(k3), heads(v3)

    s = jnp.einsum('nqd,nkd->nqk',
                   qh.astype(MATMUL_DTYPE), kh.astype(MATMUL_DTYPE),
                   preferred_element_type=jnp.float32)               # (H*BB, S, S)

    bmat = bias_ref[...]                                             # (BB, S)
    bias_all = jnp.concatenate([bmat] * H, axis=0)                   # (H*BB, S), row n -> batch n%BB
    s = s + bias_all[:, None, :]                                     # additive key-padding mask

    m = jnp.max(s, axis=-1, keepdims=True)
    e = jnp.exp(s - m)
    prob = e * pl.reciprocal(jnp.sum(e, axis=-1, keepdims=True), approx=False)

    o = jnp.einsum('nqk,nkd->nqd',
                   prob.astype(MATMUL_DTYPE), vh.astype(MATMUL_DTYPE),
                   preferred_element_type=jnp.float32)               # (H*BB, S, hd)

    # ---- re-concatenate heads along lanes, then ONE out-projection with K = D ----
    attn = jnp.concatenate([o[h * BB:(h + 1) * BB] for h in range(H)], axis=-1)  # (BB, S, D)
    attn = _mm(attn.reshape(BB * S, D), wa[:, D3:D3 + D]) + p[1:2, 0:D]

    # dropout(p=args.dropout) is identity in eval mode
    x1 = _layer_norm(x + attn, p[2:3, 0:D], p[3:4, 0:D])

    # ---- feed-forward: relu(fc1) -> fc2 ----
    h1 = jnp.maximum(_mm(x1, wa[:, D3 + D:D3 + D + F]) + p[4:5, 0:F], 0.0)
    y = _mm(h1, w2_ref[...]) + p[5:6, 0:D]
    x2 = _layer_norm(x1 + y, p[6:7, 0:D], p[7:8, 0:D])

    out_ref[...] = x2.reshape(BB, S, D)


def exp_transformer_encoder_layer(x_sbd, padding_mask, params):
    """x_sbd: (seq, batch, dim) f32; padding_mask: (batch, seq), 1 == padded key."""
    S, B, D = x_sbd.shape
    F = params['w1'].shape[0]
    H = NUM_HEADS

    x_bsd = jnp.transpose(x_sbd, (1, 0, 2)).astype(jnp.float32)          # (B, S, D)
    mask_bias = padding_mask.astype(jnp.float32) * jnp.float32(NEG_BIG)  # (B, S)

    # ---- pack operands: one lane-dense weight slab, W2, one bias/LN-param slab ----
    w_a = jnp.concatenate([params['wq'].T, params['wk'].T, params['wv'].T,
                           params['wo'].T, params['w1'].T], axis=1)      # (D, 3D + D + F)
    w2_t = jnp.transpose(params['w2'])                                   # (F, D)

    pw = max(3 * D, F)

    def row(vec):
        return jnp.pad(vec, (0, pw - vec.shape[0])).reshape(1, pw)

    p_slab = jnp.concatenate([
        row(jnp.concatenate([params['bq'], params['bk'], params['bv']])),  # row 0: bqkv
        row(params['bo']),                                                 # row 1
        row(params['ln1_g']), row(params['ln1_b']),                        # rows 2, 3
        row(params['b1']),                                                 # row 4
        row(params['b2']),                                                 # row 5
        row(params['ln2_g']), row(params['ln2_b']),                        # rows 6, 7
    ], axis=0)                                                             # (8, pw)

    bb = B                       # batch block: whole batch in one grid step at toy sizes;
    grid = (pl.cdiv(B, bb),)     # shrink bb for large B (v7x: 2 TCs, 64 MiB VMEM budget)

    out_bsd = pl.pallas_call(
        functools.partial(encoder_layer_kernel, num_heads=H),
        out_shape=jax.ShapeDtypeStruct((B, S, D), jnp.float32),
        grid=grid,
        in_specs=[
            pl.BlockSpec((bb, S, D), lambda i: (i, 0, 0)),
            pl.BlockSpec((bb, S), lambda i: (i, 0)),
            pl.BlockSpec((D, 3 * D + D + F), lambda i: (0, 0)),
            pl.BlockSpec((F, D), lambda i: (0, 0)),
            pl.BlockSpec((8, pw), lambda i: (0, 0)),
        ],
        out_specs=pl.BlockSpec((bb, S, D), lambda i: (i, 0, 0)),
        compiler_params=pltpu.CompilerParams(dimension_semantics=("parallel",)),
    )(x_bsd, mask_bias, w_a, w2_t, p_slab)

    return jnp.transpose(out_bsd, (1, 0, 2))     # back to (seq, batch, dim)


# -------------------- pure-JAX reference (for correctness check) --------------------
def reference_forward(x_sbd, padding_mask, params):
    S, B, D = x_sbd.shape
    H, hd = NUM_HEADS, D // NUM_HEADS
    x = jnp.transpose(x_sbd, (1, 0, 2)).astype(jnp.float32)

    def lin(v, w, b):
        return v @ w.T + b

    q = lin(x, params['wq'], params['bq']) * (hd ** -0.5)
    k = lin(x, params['wk'], params['bk'])
    v_ = lin(x, params['wv'], params['bv'])

    def split(t):
        return t.reshape(B, S, H, hd).transpose(0, 2, 1, 3)

    qh, kh, vh = split(q), split(k), split(v_)
    s = jnp.einsum('bhqd,bhkd->bhqk', qh, kh)
    s = jnp.where(padding_mask.astype(bool)[:, None, None, :], -jnp.inf, s)
    p = jax.nn.softmax(s, axis=-1)
    o = jnp.einsum('bhqk,bhkd->bhqd', p, vh).transpose(0, 2, 1, 3).reshape(B, S, D)
    o = lin(o, params['wo'], params['bo'])

    def ln(t, g, be):
        mu = t.mean(-1, keepdims=True)
        var = ((t - mu) ** 2).mean(-1, keepdims=True)
        return (t - mu) / jnp.sqrt(var + LN_EPS) * g + be

    x1 = ln(x + o, params['ln1_g'], params['ln1_b'])
    h1 = jax.nn.relu(lin(x1, params['w1'], params['b1']))
    y = lin(h1, params['w2'], params['b2'])
    x2 = ln(x1 + y, params['ln2_g'], params['ln2_b'])
    return jnp.transpose(x2, (1, 0, 2))


# -------------------- deterministic parameter init --------------------
def xavier_uniform(key, out_f, in_f):
    bound = (6.0 / (in_f + out_f)) ** 0.5
    return jax.random.uniform(key, (out_f, in_f), jnp.float32, -bound, bound)


def make_params(key):
    keys = jax.random.split(key, 6)
    D, F = EMBED_DIM, FFN_DIM
    return {
        'wq': xavier_uniform(keys[0], D, D), 'bq': jnp.zeros((D,), jnp.float32),
        'wk': xavier_uniform(keys[1], D, D), 'bk': jnp.zeros((D,), jnp.float32),
        'wv': xavier_uniform(keys[2], D, D), 'bv': jnp.zeros((D,), jnp.float32),
        'wo': xavier_uniform(keys[3], D, D), 'bo': jnp.zeros((D,), jnp.float32),
        'ln1_g': jnp.ones((D,), jnp.float32), 'ln1_b': jnp.zeros((D,), jnp.float32),
        'w1': xavier_uniform(keys[4], F, D), 'b1': jnp.zeros((F,), jnp.float32),
        'w2': xavier_uniform(keys[5], D, F), 'b2': jnp.zeros((D,), jnp.float32),
        'ln2_g': jnp.ones((D,), jnp.float32), 'ln2_b': jnp.zeros((D,), jnp.float32),
    }


if __name__ == "__main__":
    root = jax.random.PRNGKey(0)
    kx, kp = jax.random.split(root)
    params = make_params(kp)

    # x: (seq_len, batch, embed_dim) as in the PyTorch module
    x = jax.random.normal(kx, (SEQ_LEN, BATCH, EMBED_DIM), jnp.float32)
    # encoder_padding_mask: (batch, seq_len), 1 == padded position
    padding_mask = jnp.zeros((BATCH, SEQ_LEN), jnp.int32).at[1, -2:].set(1)

    out = exp_transformer_encoder_layer(x, padding_mask, params)
    out = jax.block_until_ready(out)

    ref = reference_forward(x, padding_mask, params)
    tol = 1e-4 if MATMUL_DTYPE == jnp.float32 else 2e-2
    assert out.shape == (SEQ_LEN, BATCH, EMBED_DIM)
    assert jnp.allclose(out, ref, atol=tol, rtol=tol), \
        f"max abs err {jnp.max(jnp.abs(out - ref))}"
    print("KERNEL_OK")
</pallas_src>

<mosaic_0001>
module attributes {stable_mosaic.version = 11 : i64} {
  func.func @encoder_layer_kernel(%arg0: i32, %arg1: memref<2x8x32xf32, #tpu.memory_space<vmem>>, %arg2: memref<2x8xf32, #tpu.memory_space<vmem>>, %arg3: memref<32x192xf32, #tpu.memory_space<vmem>>, %arg4: memref<64x32xf32, #tpu.memory_space<vmem>>, %arg5: memref<8x96xf32, #tpu.memory_space<vmem>>, %arg6: memref<2x8x32xf32, #tpu.memory_space<vmem>>) attributes {dimension_semantics = [#tpu.dimension_semantics<parallel>], iteration_bounds = array<i64: 1>, scalar_prefetch = 0 : i64, scratch_operands = 0 : i64, tpu.core_type = #tpu.core_type<tc>, window_params = [{transform_indices = @transform_0, window_bounds = array<i64: 2, 8, 32>}, {transform_indices = @transform_1, window_bounds = array<i64: 2, 8>}, {pipeline_mode = #tpu.pipeline_mode<synchronous>, transform_indices = @transform_2, window_bounds = array<i64: 32, 192>}, {pipeline_mode = #tpu.pipeline_mode<synchronous>, transform_indices = @transform_3, window_bounds = array<i64: 64, 32>}, {pipeline_mode = #tpu.pipeline_mode<synchronous>, transform_indices = @transform_4, window_bounds = array<i64: 8, 96>}, {transform_indices = @transform_5, window_bounds = array<i64: 2, 8, 32>}]} {
    %c0 = arith.constant 0 : index
    %c0_0 = arith.constant 0 : index
    %c0_1 = arith.constant 0 : index
    %0 = vector.load %arg1[%c0, %c0_0, %c0_1] : memref<2x8x32xf32, #tpu.memory_space<vmem>>, vector<2x8x32xf32>
    %1 = vector.shape_cast %0 : vector<2x8x32xf32> to vector<16x32xf32>
    %c0_2 = arith.constant 0 : index
    %c0_3 = arith.constant 0 : index
    %2 = vector.load %arg3[%c0_2, %c0_3] : memref<32x192xf32, #tpu.memory_space<vmem>>, vector<32x192xf32>
    %c0_4 = arith.constant 0 : index
    %c0_5 = arith.constant 0 : index
    %3 = vector.load %arg5[%c0_4, %c0_5] : memref<8x96xf32, #tpu.memory_space<vmem>>, vector<8x96xf32>
    %4 = vector.extract_strided_slice %2 {offsets = [0, 0], sizes = [32, 96], strides = [1, 1]} : vector<32x192xf32> to vector<32x96xf32>
    %cst = arith.constant dense<0.000000e+00> : vector<16x96xf32>
    %5 = tpu.matmul %1, %4, %cst {dimension_numbers = #tpu.dot_dimension_numbers<[1], [0], [0], [1], [0, 0, 1, 1], [], []>} : vector<16x32xf32>, vector<32x96xf32>, vector<16x96xf32> -> vector<16x96xf32>
    %6 = vector.extract_strided_slice %3 {offsets = [0, 0], sizes = [1, 96], strides = [1, 1]} : vector<8x96xf32> to vector<1x96xf32>
    %7 = vector.broadcast %6 : vector<1x96xf32> to vector<16x96xf32>
    %8 = arith.addf %5, %7 : vector<16x96xf32>
    %9 = vector.extract_strided_slice %8 {offsets = [0, 0], sizes = [16, 32], strides = [1, 1]} : vector<16x96xf32> to vector<16x32xf32>
    %cst_6 = arith.constant 0.353553385 : f32
    %10 = vector.broadcast %cst_6 : f32 to vector<16x32xf32>
    %11 = arith.mulf %9, %10 : vector<16x32xf32>
    %12 = vector.extract_strided_slice %8 {offsets = [0, 32], sizes = [16, 32], strides = [1, 1]} : vector<16x96xf32> to vector<16x32xf32>
    %13 = vector.extract_strided_slice %8 {offsets = [0, 64], sizes = [16, 32], strides = [1, 1]} : vector<16x96xf32> to vector<16x32xf32>
    %14 = vector.shape_cast %11 : vector<16x32xf32> to vector<2x8x32xf32>
    %15 = vector.shape_cast %12 : vector<16x32xf32> to vector<2x8x32xf32>
    %16 = vector.shape_cast %13 : vector<16x32xf32> to vector<2x8x32xf32>
    %17 = vector.extract_strided_slice %14 {offsets = [0, 0, 0], sizes = [2, 8, 8], strides = [1, 1, 1]} : vector<2x8x32xf32> to vector<2x8x8xf32>
    %18 = vector.extract_strided_slice %14 {offsets = [0, 0, 8], sizes = [2, 8, 8], strides = [1, 1, 1]} : vector<2x8x32xf32> to vector<2x8x8xf32>
    %19 = vector.extract_strided_slice %14 {offsets = [0, 0, 16], sizes = [2, 8, 8], strides = [1, 1, 1]} : vector<2x8x32xf32> to vector<2x8x8xf32>
    %20 = vector.extract_strided_slice %14 {offsets = [0, 0, 24], sizes = [2, 8, 8], strides = [1, 1, 1]} : vector<2x8x32xf32> to vector<2x8x8xf32>
    %21 = tpu.concatenate %17, %18, %19, %20 in 0 : vector<2x8x8xf32>, vector<2x8x8xf32>, vector<2x8x8xf32>, vector<2x8x8xf32> -> vector<8x8x8xf32>
    %22 = vector.extract_strided_slice %15 {offsets = [0, 0, 0], sizes = [2, 8, 8], strides = [1, 1, 1]} : vector<2x8x32xf32> to vector<2x8x8xf32>
    %23 = vector.extract_strided_slice %15 {offsets = [0, 0, 8], sizes = [2, 8, 8], strides = [1, 1, 1]} : vector<2x8x32xf32> to vector<2x8x8xf32>
    %24 = vector.extract_strided_slice %15 {offsets = [0, 0, 16], sizes = [2, 8, 8], strides = [1, 1, 1]} : vector<2x8x32xf32> to vector<2x8x8xf32>
    %25 = vector.extract_strided_slice %15 {offsets = [0, 0, 24], sizes = [2, 8, 8], strides = [1, 1, 1]} : vector<2x8x32xf32> to vector<2x8x8xf32>
    %26 = tpu.concatenate %22, %23, %24, %25 in 0 : vector<2x8x8xf32>, vector<2x8x8xf32>, vector<2x8x8xf32>, vector<2x8x8xf32> -> vector<8x8x8xf32>
    %27 = vector.extract_strided_slice %16 {offsets = [0, 0, 0], sizes = [2, 8, 8], strides = [1, 1, 1]} : vector<2x8x32xf32> to vector<2x8x8xf32>
    %28 = vector.extract_strided_slice %16 {offsets = [0, 0, 8], sizes = [2, 8, 8], strides = [1, 1, 1]} : vector<2x8x32xf32> to vector<2x8x8xf32>
    %29 = vector.extract_strided_slice %16 {offsets = [0, 0, 16], sizes = [2, 8, 8], strides = [1, 1, 1]} : vector<2x8x32xf32> to vector<2x8x8xf32>
    %30 = vector.extract_strided_slice %16 {offsets = [0, 0, 24], sizes = [2, 8, 8], strides = [1, 1, 1]} : vector<2x8x32xf32> to vector<2x8x8xf32>
    %31 = tpu.concatenate %27, %28, %29, %30 in 0 : vector<2x8x8xf32>, vector<2x8x8xf32>, vector<2x8x8xf32>, vector<2x8x8xf32> -> vector<8x8x8xf32>
    "tpu.trace_start"() <{level = 10 : i32, message = "nqd,nkd->nqk"}> : () -> ()
    %cst_7 = arith.constant dense<0.000000e+00> : vector<8x8x8xf32>
    %32 = tpu.matmul %21, %26, %cst_7 {dimension_numbers = #tpu.dot_dimension_numbers<[2], [2], [1], [1], [0, 0, 0, 1, 1, 1], [0], [0]>} : vector<8x8x8xf32>, vector<8x8x8xf32>, vector<8x8x8xf32> -> vector<8x8x8xf32>
    "tpu.trace_stop"() : () -> ()
    %c0_8 = arith.constant 0 : index
    %c0_9 = arith.constant 0 : index
    %33 = vector.load %arg2[%c0_8, %c0_9] : memref<2x8xf32, #tpu.memory_space<vmem>>, vector<2x8xf32>
    %34 = tpu.concatenate %33, %33, %33, %33 in 0 : vector<2x8xf32>, vector<2x8xf32>, vector<2x8xf32>, vector<2x8xf32> -> vector<8x8xf32>
    %35 = vector.shape_cast %34 : vector<8x8xf32> to vector<8x1x8xf32>
    %36 = vector.broadcast %35 : vector<8x1x8xf32> to vector<8x8x8xf32>
    %37 = arith.addf %32, %36 : vector<8x8x8xf32>
    %cst_10 = arith.constant dense<0xFF800000> : vector<8x8xf32>
    %38 = vector.multi_reduction <maximumf>, %37, %cst_10 [2] : vector<8x8x8xf32> to vector<8x8xf32>
    %39 = vector.shape_cast %38 : vector<8x8xf32> to vector<8x8x1xf32>
    %40 = vector.broadcast %39 : vector<8x8x1xf32> to vector<8x8x8xf32>
    %41 = arith.subf %37, %40 : vector<8x8x8xf32>
    %42 = math.exp %41 : vector<8x8x8xf32>
    %cst_11 = arith.constant dense<0.000000e+00> : vector<8x8xf32>
    %43 = vector.multi_reduction <add>, %42, %cst_11 [2] : vector<8x8x8xf32> to vector<8x8xf32>
    %44 = vector.shape_cast %43 : vector<8x8xf32> to vector<8x8x1xf32>
    %45 = tpu.reciprocal %44 : vector<8x8x1xf32> -> vector<8x8x1xf32>
    %46 = vector.broadcast %45 : vector<8x8x1xf32> to vector<8x8x8xf32>
    %47 = arith.mulf %42, %46 : vector<8x8x8xf32>
    "tpu.trace_start"() <{level = 10 : i32, message = "nqk,nkd->nqd"}> : () -> ()
    %cst_12 = arith.constant dense<0.000000e+00> : vector<8x8x8xf32>
    %48 = tpu.matmul %47, %31, %cst_12 {dimension_numbers = #tpu.dot_dimension_numbers<[2], [1], [1], [2], [0, 0, 0, 1, 1, 2], [0], [0]>} : vector<8x8x8xf32>, vector<8x8x8xf32>, vector<8x8x8xf32> -> vector<8x8x8xf32>
    "tpu.trace_stop"() : () -> ()
    %49 = vector.extract_strided_slice %48 {offsets = [0, 0, 0], sizes = [2, 8, 8], strides = [1, 1, 1]} : vector<8x8x8xf32> to vector<2x8x8xf32>
    %50 = vector.extract_strided_slice %48 {offsets = [2, 0, 0], sizes = [2, 8, 8], strides = [1, 1, 1]} : vector<8x8x8xf32> to vector<2x8x8xf32>
    %51 = vector.extract_strided_slice %48 {offsets = [4, 0, 0], sizes = [2, 8, 8], strides = [1, 1, 1]} : vector<8x8x8xf32> to vector<2x8x8xf32>
    %52 = vector.extract_strided_slice %48 {offsets = [6, 0, 0], sizes = [2, 8, 8], strides = [1, 1, 1]} : vector<8x8x8xf32> to vector<2x8x8xf32>
    %53 = tpu.concatenate %49, %50, %51, %52 in 2 : vector<2x8x8xf32>, vector<2x8x8xf32>, vector<2x8x8xf32>, vector<2x8x8xf32> -> vector<2x8x32xf32>
    %54 = vector.shape_cast %53 : vector<2x8x32xf32> to vector<16x32xf32>
    %55 = vector.extract_strided_slice %2 {offsets = [0, 96], sizes = [32, 32], strides = [1, 1]} : vector<32x192xf32> to vector<32x32xf32>
    %cst_13 = arith.constant dense<0.000000e+00> : vector<16x32xf32>
    %56 = tpu.matmul %54, %55, %cst_13 {dimension_numbers = #tpu.dot_dimension_numbers<[1], [0], [0], [1], [0, 0, 1, 1], [], []>} : vector<16x32xf32>, vector<32x32xf32>, vector<16x32xf32> -> vector<16x32xf32>
    %57 = vector.extract_strided_slice %3 {offsets = [1, 0], sizes = [1, 32], strides = [1, 1]} : vector<8x96xf32> to vector<1x32xf32>
    %58 = vector.broadcast %57 : vector<1x32xf32> to vector<16x32xf32>
    %59 = arith.addf %56, %58 : vector<16x32xf32>
    %60 = arith.addf %1, %59 : vector<16x32xf32>
    %61 = vector.extract_strided_slice %3 {offsets = [2, 0], sizes = [1, 32], strides = [1, 1]} : vector<8x96xf32> to vector<1x32xf32>
    %62 = vector.extract_strided_slice %3 {offsets = [3, 0], sizes = [1, 32], strides = [1, 1]} : vector<8x96xf32> to vector<1x32xf32>
    %cst_14 = arith.constant dense<0.000000e+00> : vector<16xf32>
    %63 = vector.multi_reduction <add>, %60, %cst_14 [1] : vector<16x32xf32> to vector<16xf32>
    %64 = vector.shape_cast %63 : vector<16xf32> to vector<16x1xf32>
    %cst_15 = arith.constant 3.200000e+01 : f32
    %65 = vector.broadcast %cst_15 : f32 to vector<16x1xf32>
    %66 = arith.divf %64, %65 : vector<16x1xf32>
    %67 = vector.broadcast %66 : vector<16x1xf32> to vector<16x32xf32>
    %68 = arith.subf %60, %67 : vector<16x32xf32>
    %69 = arith.mulf %68, %68 : vector<16x32xf32>
    %cst_16 = arith.constant dense<0.000000e+00> : vector<16xf32>
    %70 = vector.multi_reduction <add>, %69, %cst_16 [1] : vector<16x32xf32> to vector<16xf32>
    %71 = vector.shape_cast %70 : vector<16xf32> to vector<16x1xf32>
    %cst_17 = arith.constant 3.200000e+01 : f32
    %72 = vector.broadcast %cst_17 : f32 to vector<16x1xf32>
    %73 = arith.divf %71, %72 : vector<16x1xf32>
    %74 = vector.broadcast %66 : vector<16x1xf32> to vector<16x32xf32>
    %75 = arith.subf %60, %74 : vector<16x32xf32>
    %cst_18 = arith.constant 9.99999974E-6 : f32
    %76 = vector.broadcast %cst_18 : f32 to vector<16x1xf32>
    %77 = arith.addf %73, %76 : vector<16x1xf32>
    %78 = math.rsqrt %77 : vector<16x1xf32>
    %79 = vector.broadcast %78 : vector<16x1xf32> to vector<16x32xf32>
    %80 = arith.mulf %75, %79 : vector<16x32xf32>
    %81 = vector.broadcast %61 : vector<1x32xf32> to vector<16x32xf32>
    %82 = arith.mulf %80, %81 : vector<16x32xf32>
    %83 = vector.broadcast %62 : vector<1x32xf32> to vector<16x32xf32>
    %84 = arith.addf %82, %83 : vector<16x32xf32>
    %85 = vector.extract_strided_slice %2 {offsets = [0, 128], sizes = [32, 64], strides = [1, 1]} : vector<32x192xf32> to vector<32x64xf32>
    %cst_19 = arith.constant dense<0.000000e+00> : vector<16x64xf32>
    %86 = tpu.matmul %84, %85, %cst_19 {dimension_numbers = #tpu.dot_dimension_numbers<[1], [0], [0], [1], [0, 0, 1, 1], [], []>} : vector<16x32xf32>, vector<32x64xf32>, vector<16x64xf32> -> vector<16x64xf32>
    %87 = vector.extract_strided_slice %3 {offsets = [4, 0], sizes = [1, 64], strides = [1, 1]} : vector<8x96xf32> to vector<1x64xf32>
    %88 = vector.broadcast %87 : vector<1x64xf32> to vector<16x64xf32>
    %89 = arith.addf %86, %88 : vector<16x64xf32>
    %cst_20 = arith.constant 0.000000e+00 : f32
    %90 = vector.broadcast %cst_20 : f32 to vector<16x64xf32>
    %91 = arith.maximumf %89, %90 : vector<16x64xf32>
    %c0_21 = arith.constant 0 : index
    %c0_22 = arith.constant 0 : index
    %92 = vector.load %arg4[%c0_21, %c0_22] : memref<64x32xf32, #tpu.memory_space<vmem>>, vector<64x32xf32>
    %cst_23 = arith.constant dense<0.000000e+00> : vector<16x32xf32>
    %93 = tpu.matmul %91, %92, %cst_23 {dimension_numbers = #tpu.dot_dimension_numbers<[1], [0], [0], [1], [0, 0, 1, 1], [], []>} : vector<16x64xf32>, vector<64x32xf32>, vector<16x32xf32> -> vector<16x32xf32>
    %94 = vector.extract_strided_slice %3 {offsets = [5, 0], sizes = [1, 32], strides = [1, 1]} : vector<8x96xf32> to vector<1x32xf32>
    %95 = vector.broadcast %94 : vector<1x32xf32> to vector<16x32xf32>
    %96 = arith.addf %93, %95 : vector<16x32xf32>
    %97 = arith.addf %84, %96 : vector<16x32xf32>
    %98 = vector.extract_strided_slice %3 {offsets = [6, 0], sizes = [1, 32], strides = [1, 1]} : vector<8x96xf32> to vector<1x32xf32>
    %99 = vector.extract_strided_slice %3 {offsets = [7, 0], sizes = [1, 32], strides = [1, 1]} : vector<8x96xf32> to vector<1x32xf32>
    %cst_24 = arith.constant dense<0.000000e+00> : vector<16xf32>
    %100 = vector.multi_reduction <add>, %97, %cst_24 [1] : vector<16x32xf32> to vector<16xf32>
    %101 = vector.shape_cast %100 : vector<16xf32> to vector<16x1xf32>
    %cst_25 = arith.constant 3.200000e+01 : f32
    %102 = vector.broadcast %cst_25 : f32 to vector<16x1xf32>
    %103 = arith.divf %101, %102 : vector<16x1xf32>
    %104 = vector.broadcast %103 : vector<16x1xf32> to vector<16x32xf32>
    %105 = arith.subf %97, %104 : vector<16x32xf32>
    %106 = arith.mulf %105, %105 : vector<16x32xf32>
    %cst_26 = arith.constant dense<0.000000e+00> : vector<16xf32>
    %107 = vector.multi_reduction <add>, %106, %cst_26 [1] : vector<16x32xf32> to vector<16xf32>
    %108 = vector.shape_cast %107 : vector<16xf32> to vector<16x1xf32>
    %cst_27 = arith.constant 3.200000e+01 : f32
    %109 = vector.broadcast %cst_27 : f32 to vector<16x1xf32>
    %110 = arith.divf %108, %109 : vector<16x1xf32>
    %111 = vector.broadcast %103 : vector<16x1xf32> to vector<16x32xf32>
    %112 = arith.subf %97, %111 : vector<16x32xf32>
    %cst_28 = arith.constant 9.99999974E-6 : f32
    %113 = vector.broadcast %cst_28 : f32 to vector<16x1xf32>
    %114 = arith.addf %110, %113 : vector<16x1xf32>
    %115 = math.rsqrt %114 : vector<16x1xf32>
    %116 = vector.broadcast %115 : vector<16x1xf32> to vector<16x32xf32>
    %117 = arith.mulf %112, %116 : vector<16x32xf32>
    %118 = vector.broadcast %98 : vector<1x32xf32> to vector<16x32xf32>
    %119 = arith.mulf %117, %118 : vector<16x32xf32>
    %120 = vector.broadcast %99 : vector<1x32xf32> to vector<16x32xf32>
    %121 = arith.addf %119, %120 : vector<16x32xf32>
    %122 = vector.shape_cast %121 : vector<16x32xf32> to vector<2x8x32xf32>
    %c0_29 = arith.constant 0 : index
    %c0_30 = arith.constant 0 : index
    %c0_31 = arith.constant 0 : index
    %123 = vector.load %arg6[%c0_29, %c0_30, %c0_31] : memref<2x8x32xf32, #tpu.memory_space<vmem>>, vector<2x8x32xf32>
    tpu.vector_store %arg6[%c0_29, %c0_30, %c0_31], %122 {strides = array<i32>} : memref<2x8x32xf32, #tpu.memory_space<vmem>>, vector<2x8x32xf32>,
    return
  }
  func.func @transform_0(%arg0: i32) -> (i32, i32, i32) {
    %c0_i32 = arith.constant 0 : i32
    %c0_i32_0 = arith.constant 0 : i32
    %c0_i32_1 = arith.constant 0 : i32
    return %arg0, %c0_i32, %c0_i32_0 : i32, i32, i32
  }
  func.func @transform_1(%arg0: i32) -> (i32, i32) {
    %c0_i32 = arith.constant 0 : i32
    %c0_i32_0 = arith.constant 0 : i32
    return %arg0, %c0_i32 : i32, i32
  }
  func.func @transform_2(%arg0: i32) -> (i32, i32) {
    %c0_i32 = arith.constant 0 : i32
    %c0_i32_0 = arith.constant 0 : i32
    %c0_i32_1 = arith.constant 0 : i32
    return %c0_i32, %c0_i32_0 : i32, i32
  }
  func.func @transform_3(%arg0: i32) -> (i32, i32) {
    %c0_i32 = arith.constant 0 : i32
    %c0_i32_0 = arith.constant 0 : i32
    %c0_i32_1 = arith.constant 0 : i32
    return %c0_i32, %c0_i32_0 : i32, i32
  }
  func.func @transform_4(%arg0: i32) -> (i32, i32) {
    %c0_i32 = arith.constant 0 : i32
    %c0_i32_0 = arith.constant 0 : i32
    %c0_i32_1 = arith.constant 0 : i32
    return %c0_i32, %c0_i32_0 : i32, i32
  }
  func.func @transform_5(%arg0: i32) -> (i32, i32, i32) {
    %c0_i32 = arith.constant 0 : i32
    %c0_i32_0 = arith.constant 0 : i32
    %c0_i32_1 = arith.constant 0 : i32
    return %arg0, %c0_i32, %c0_i32_0 : i32, i32, i32
  }
}

</mosaic_0001>

<llo_original>
// kernel: tpu_custom_call.1
$region0: #{tpu_custom_call.1}
  #allocation0 [shape = 'u32[]', space=smem, size = 0x4, offset = 0x4, fixed_abs, tag = 'smem constant byte address 0x4 - core index']
  #allocation1 [shape = 'u32[72,128]{1,0:T(1,128)}', space=vmem, size = 0x9000, scoped, tag = 'internal scratch']
  %s0 = inlined_call_operand.vmem [shape: f32[2,8,32], index: 0, kind: input, shape index: {}]
  %s1 = inlined_call_operand.vmem [shape: f32[2,8], index: 1, kind: input, shape index: {}]
  %s2 = inlined_call_operand.vmem [shape: f32[32,192], index: 2, kind: input, shape index: {}]
  %s3 = inlined_call_operand.vmem [shape: f32[64,32], index: 3, kind: input, shape index: {}]
  %s4 = inlined_call_operand.vmem [shape: f32[8,96], index: 4, kind: input, shape index: {}]
  %s5 = inlined_call_operand.hbm [shape: f32[2,8,32], index: 5, kind: output, shape index: {}]
  %s6 = sld [smem:[#allocation0]]
  $region30: #{tpu_custom_call.1} parent=0
    _
  %s8 = ssub.s32 1, %s6
  %s9 = scalar_select 0, %s8, %s6
  $region1: #{tpu_custom_call.1} parent=0
    #allocation2 [shape = 'u8[8192]{0}', space=vmem, size = 0x2000, scoped, tag = 'output window, operand 0, single buffered']
    #allocation3 [shape = 's32[1]{0}', space=sflag, size = 0x4, scoped, tag = 'scoped memory for tpu_custom_call.1']
    %10 = vsyncpa [#allocation3], 0
    // Predicated region
    $region2: #{tpu_custom_call.1} parent=1 // pred_check
      _
    $region3: #{tpu_custom_call.1} parent=1 // pred_check_branch
      %12 = sbr.rel (0) target = $region5
    $region4: #{tpu_custom_call.1} parent=1 // pred_region
      _
    $region5: #{tpu_custom_call.1} parent=1 // pred_fallthru
      _
    // Predicated region
    $region6: #{tpu_custom_call.1} parent=1 // pred_check
      _
    $region7: #{tpu_custom_call.1} parent=1 // pred_check_branch
      %14 = sbr.rel (0) target = $region9
    $region8: #{tpu_custom_call.1} parent=1 // pred_region
      _
    $region9: #{tpu_custom_call.1} parent=1 // pred_fallthru
      _
    // Predicated region
    $region10: #{tpu_custom_call.1} parent=1 // pred_check
      _
    $region11: #{tpu_custom_call.1} parent=1 // pred_check_branch
      %16 = sbr.rel (0) target = $region13
    $region12: #{tpu_custom_call.1} parent=1 // pred_region
      _
    $region13: #{tpu_custom_call.1} parent=1 // pred_fallthru
      _
    // Predicated region
    $region14: #{tpu_custom_call.1} parent=1 // pred_check
      _
    $region15: #{tpu_custom_call.1} parent=1 // pred_check_branch
      %18 = sbr.rel (0) target = $region17
    $region16: #{tpu_custom_call.1} parent=1 // pred_region
      _
    $region17: #{tpu_custom_call.1} parent=1 // pred_fallthru
      _
    // Predicated region
    $region18: #{tpu_custom_call.1} parent=1 // pred_check
      _
    $region19: #{tpu_custom_call.1} parent=1 // pred_check_branch
      %20 = sbr.rel (0) target = $region21
    $region20: #{tpu_custom_call.1} parent=1 // pred_region
      _
    $region21: #{tpu_custom_call.1} parent=1 // pred_fallthru
      _
    %v21 = vld [vmem:[%s0] sm:$0xff]
    %v22 = vld [vmem:[%s0 + $0x8] sm:$0xff]
    %v23 = vld [vmem:[%s2] sm:$0xff]
    %v24 = vld [vmem:[%s2 + $0x8] sm:$0xff]
    %v25 = vld [vmem:[%s2 + $0x10] sm:$0xff]
    %v26 = vld [vmem:[%s2 + $0x18] sm:$0xff]
    %v27 = vld [vmem:[%s2 + $0x20] sm:$0xff]
    %v28 = vld [vmem:[%s2 + $0x28] sm:$0xff]
    %v29 = vld [vmem:[%s2 + $0x30] sm:$0xff]
    %v30 = vld [vmem:[%s2 + $0x38] sm:$0xff]
    %v31 = vld [vmem:[%s4] sm:$0xff]
    %v32 = vperm.slane %v31, 0
    %vm33 = vcmask 261120
    %v35 = vsel %vm33, %v21, 0
    %v38 = vsel %vm33, %v22, 0
    %40 = vmatpush.msra.mxu0 0.0
    %41 = vmatpush.msra.mxu0 0.0
    %42 = vmatpush.msra.mxu0 0.0
    %43 = vmatpush.msra.mxu0 0.0
    %44 = vmatpush.msra.mxu0 0.0
    %45 = vmatpush.msra.mxu0 0.0
    %46 = vmatpush.msra.mxu0 0.0
    %47 = vmatpush.msra.mxu0 0.0
    %48 = vmatpush.msra.mxu0 0.0
    %49 = vmatpush.msra.mxu0 0.0
    %50 = vmatpush.msra.mxu0 0.0
    %51 = vmatpush.msra.mxu0 0.0
    %52 = vmatpush.msra.mxu0 %v29
    %53 = vmatpush.msra.mxu0 %v27
    %54 = vmatpush.msra.mxu0 %v25
    %55 = vmatpush.msra.mxu0 %v23
    %56 = vmatmul.f32.gmra.mxu0 %v35
    %v57 = vpop.f32.mrf.mxu0
    %v58 = vadd.f32 %v32, %v57
    %59 = vmatmul.f32.gmra.mxu0 %v38
    %v60 = vpop.f32.mrf.mxu0
    %v61 = vadd.f32 %v32, %v60
    %62 = vdwg.mxu0
    %v63 = vmul.f32 %v58, 0.35355338
    %v64 = vmul.f32 %v61, 0.35355338
    %67 = vrot.lane.b32.xlu0 %v63, 120
    %v68 = vpop.permute.xlu0 %67
    %69 = vrot.lane.b32.xlu0 %v64, 120
    %v70 = vpop.permute.xlu0 %69
    %71 = vrot.lane.b32.xlu0 %v63, 112
    %v72 = vpop.permute.xlu0 %71
    %73 = vrot.lane.b32.xlu0 %v64, 112
    %v74 = vpop.permute.xlu0 %73
    %75 = vrot.lane.b32.xlu0 %v63, 104
    %v76 = vpop.permute.xlu0 %75
    %77 = vrot.lane.b32.xlu0 %v64, 104
    %v78 = vpop.permute.xlu0 %77
    %81 = vrot.lane.b32.xlu0 %v58, 120
    %v82 = vpop.permute.xlu0 %81
    %83 = vrot.lane.b32.xlu0 %v61, 120
    %v84 = vpop.permute.xlu0 %83
    %85 = vrot.lane.b32.xlu0 %v58, 112
    %v86 = vpop.permute.xlu0 %85
    %87 = vrot.lane.b32.xlu0 %v61, 112
    %v88 = vpop.permute.xlu0 %87
    %89 = vrot.lane.b32.xlu0 %v58, 104
    %v90 = vpop.permute.xlu0 %89
    %91 = vrot.lane.b32.xlu0 %v61, 104
    %v92 = vpop.permute.xlu0 %91
    %v93 = vld [vmem:[%s1] sm:$0x3]
    %v95 = vrot.slane %v93, 6
    %v97 = vrot.slane %v93, 4
    %v99 = vrot.slane %v93, 2
    %vm101 = vcmask 1041408
    %v102 = vsel %vm101, %v93, %v95
    %vm103 = vcmask 1043456
    %v104 = vsel %vm103, %v102, %v97
    %vm105 = vcmask 1045504
    %v106 = vsel %vm105, %v104, %v99
    %v108 = vrot.slane %v106, 1
    %v109 = vrot.slane %v106, 2
    %v110 = vrot.slane %v106, 3
    %v111 = vrot.slane %v106, 4
    %v112 = vrot.slane %v106, 5
    %v113 = vrot.slane %v106, 6
    %v114 = vrot.slane %v106, 7
    %v115 = vperm.slane %v106, 0
    %v116 = vperm.slane %v108, 0
    %v117 = vperm.slane %v109, 0
    %v118 = vperm.slane %v110, 0
    %v119 = vperm.slane %v111, 0
    %v120 = vperm.slane %v112, 0
    %v121 = vperm.slane %v113, 0
    %v122 = vperm.slane %v114, 0
    %131 = vrot.lane.b32.xlu0 %v58, 96
    %v132 = vpop.permute.xlu0 %131
    %vm133 = vcmask 64512
    %v134 = vsel %vm133, %v63, 0
    %v136 = vsel %vm133, %v132, 0
    %138 = vmatpush.xpose.msra.mxu0 0.0
    %139 = vmatpush.xpose.msra.mxu0 0.0
    %140 = vmatpush.xpose.msra.mxu0 0.0
    %141 = vmatpush.xpose.msra.mxu0 0.0
    %142 = vmatpush.xpose.msra.mxu0 0.0
    %143 = vmatpush.xpose.msra.mxu0 0.0
    %144 = vmatpush.xpose.msra.mxu0 0.0
    %145 = vmatpush.xpose.msra.mxu0 0.0
    %146 = vmatpush.xpose.msra.mxu0 0.0
    %147 = vmatpush.xpose.msra.mxu0 0.0
    %148 = vmatpush.xpose.msra.mxu0 0.0
    %149 = vmatpush.xpose.msra.mxu0 0.0
    %150 = vmatpush.xpose.msra.mxu0 0.0
    %151 = vmatpush.xpose.msra.mxu0 0.0
    %152 = vmatpush.xpose.msra.mxu0 0.0
    %153 = vmatpush.xpose.msra.mxu0 %v136
    %154 = vmatmul.f32.gmra.mxu0 %v134
    %v155 = vpop.f32.mrf.mxu0
    %v156 = vadd.f32 %v115, %v155
    %157 = vdwg.mxu0
    %158 = vrot.lane.b32.xlu0 %v61, 96
    %v159 = vpop.permute.xlu0 %158
    %v160 = vsel %vm133, %v64, 0
    %v162 = vsel %vm133, %v159, 0
    %164 = vmatpush.xpose.msra.mxu0 0.0
    %165 = vmatpush.xpose.msra.mxu0 0.0
    %166 = vmatpush.xpose.msra.mxu0 0.0
    %167 = vmatpush.xpose.msra.mxu0 0.0
    %168 = vmatpush.xpose.msra.mxu0 0.0
    %169 = vmatpush.xpose.msra.mxu0 0.0
    %170 = vmatpush.xpose.msra.mxu0 0.0
    %171 = vmatpush.xpose.msra.mxu0 0.0
    %172 = vmatpush.xpose.msra.mxu0 0.0
    %173 = vmatpush.xpose.msra.mxu0 0.0
    %174 = vmatpush.xpose.msra.mxu0 0.0
    %175 = vmatpush.xpose.msra.mxu0 0.0
    %176 = vmatpush.xpose.msra.mxu0 0.0
    %177 = vmatpush.xpose.msra.mxu0 0.0
    %178 = vmatpush.xpose.msra.mxu0 0.0
    %179 = vmatpush.xpose.msra.mxu0 %v162
    %180 = vmatmul.f32.gmra.mxu0 %v160
    %v181 = vpop.f32.mrf.mxu0
    %v182 = vadd.f32 %v116, %v181
    %183 = vdwg.mxu0
    %184 = vrot.lane.b32.xlu0 %v82, 96
    %v185 = vpop.permute.xlu0 %184
    %v186 = vsel %vm133, %v68, 0
    %v188 = vsel %vm133, %v185, 0
    %190 = vmatpush.xpose.msra.mxu0 0.0
    %191 = vmatpush.xpose.msra.mxu0 0.0
    %192 = vmatpush.xpose.msra.mxu0 0.0
    %193 = vmatpush.xpose.msra.mxu0 0.0
    %194 = vmatpush.xpose.msra.mxu0 0.0
    %195 = vmatpush.xpose.msra.mxu0 0.0
    %196 = vmatpush.xpose.msra.mxu0 0.0
    %197 = vmatpush.xpose.msra.mxu0 0.0
    %198 = vmatpush.xpose.msra.mxu0 0.0
    %199 = vmatpush.xpose.msra.mxu0 0.0
    %200 = vmatpush.xpose.msra.mxu0 0.0
    %201 = vmatpush.xpose.msra.mxu0 0.0
    %202 = vmatpush.xpose.msra.mxu0 0.0
    %203 = vmatpush.xpose.msra.mxu0 0.0
    %204 = vmatpush.xpose.msra.mxu0 0.0
    %205 = vmatpush.xpose.msra.mxu0 %v188
    %206 = vmatmul.f32.gmra.mxu0 %v186
    %v207 = vpop.f32.mrf.mxu0
    %v208 = vadd.f32 %v117, %v207
    %209 = vdwg.mxu0
    %210 = vrot.lane.b32.xlu0 %v84, 96
    %v211 = vpop.permute.xlu0 %210
    %v212 = vsel %vm133, %v70, 0
    %v214 = vsel %vm133, %v211, 0
    %216 = vmatpush.xpose.msra.mxu0 0.0
    %217 = vmatpush.xpose.msra.mxu0 0.0
    %218 = vmatpush.xpose.msra.mxu0 0.0
    %219 = vmatpush.xpose.msra.mxu0 0.0
    %220 = vmatpush.xpose.msra.mxu0 0.0
    %221 = vmatpush.xpose.msra.mxu0 0.0
    %222 = vmatpush.xpose.msra.mxu0 0.0
    %223 = vmatpush.xpose.msra.mxu0 0.0
    %224 = vmatpush.xpose.msra.mxu0 0.0
    %225 = vmatpush.xpose.msra.mxu0 0.0
    %226 = vmatpush.xpose.msra.mxu0 0.0
    %227 = vmatpush.xpose.msra.mxu0 0.0
    %228 = vmatpush.xpose.msra.mxu0 0.0
    %229 = vmatpush.xpose.msra.mxu0 0.0
    %230 = vmatpush.xpose.msra.mxu0 0.0
    %231 = vmatpush.xpose.msra.mxu0 %v214
    %232 = vmatmul.f32.gmra.mxu0 %v212
    %v233 = vpop.f32.mrf.mxu0
    %v234 = vadd.f32 %v118, %v233
    %235 = vdwg.mxu0
    %236 = vrot.lane.b32.xlu0 %v86, 96
    %v237 = vpop.permute.xlu0 %236
    %v238 = vsel %vm133, %v72, 0
    %v240 = vsel %vm133, %v237, 0
    %242 = vmatpush.xpose.msra.mxu0 0.0
    %243 = vmatpush.xpose.msra.mxu0 0.0
    %244 = vmatpush.xpose.msra.mxu0 0.0
    %245 = vmatpush.xpose.msra.mxu0 0.0
    %246 = vmatpush.xpose.msra.mxu0 0.0
    %247 = vmatpush.xpose.msra.mxu0 0.0
    %248 = vmatpush.xpose.msra.mxu0 0.0
    %249 = vmatpush.xpose.msra.mxu0 0.0
    %250 = vmatpush.xpose.msra.mxu0 0.0
    %251 = vmatpush.xpose.msra.mxu0 0.0
    %252 = vmatpush.xpose.msra.mxu0 0.0
    %253 = vmatpush.xpose.msra.mxu0 0.0
    %254 = vmatpush.xpose.msra.mxu0 0.0
    %255 = vmatpush.xpose.msra.mxu0 0.0
    %256 = vmatpush.xpose.msra.mxu0 0.0
    %257 = vmatpush.xpose.msra.mxu0 %v240
    %258 = vmatmul.f32.gmra.mxu0 %v238
    %v259 = vpop.f32.mrf.mxu0
    %v260 = vadd.f32 %v119, %v259
    %261 = vdwg.mxu0
    %262 = vrot.lane.b32.xlu0 %v88, 96
    %v263 = vpop.permute.xlu0 %262
    %v264 = vsel %vm133, %v74, 0
    %v266 = vsel %vm133, %v263, 0
    %268 = vmatpush.xpose.msra.mxu0 0.0
    %269 = vmatpush.xpose.msra.mxu0 0.0
    %270 = vmatpush.xpose.msra.mxu0 0.0
    %271 = vmatpush.xpose.msra.mxu0 0.0
    %272 = vmatpush.xpose.msra.mxu0 0.0
    %273 = vmatpush.xpose.msra.mxu0 0.0
    %274 = vmatpush.xpose.msra.mxu0 0.0
    %275 = vmatpush.xpose.msra.mxu0 0.0
    %276 = vmatpush.xpose.msra.mxu0 0.0
    %277 = vmatpush.xpose.msra.mxu0 0.0
    %278 = vmatpush.xpose.msra.mxu0 0.0
    %279 = vmatpush.xpose.msra.mxu0 0.0
    %280 = vmatpush.xpose.msra.mxu0 0.0
    %281 = vmatpush.xpose.msra.mxu0 0.0
    %282 = vmatpush.xpose.msra.mxu0 0.0
    %283 = vmatpush.xpose.msra.mxu0 %v266
    %284 = vmatmul.f32.gmra.mxu0 %v264
    %v285 = vpop.f32.mrf.mxu0
    %v286 = vadd.f32 %v120, %v285
    %287 = vdwg.mxu0
    %288 = vrot.lane.b32.xlu0 %v90, 96
    %v289 = vpop.permute.xlu0 %288
    %v290 = vsel %vm133, %v76, 0
    %v292 = vsel %vm133, %v289, 0
    %294 = vmatpush.xpose.msra.mxu0 0.0
    %295 = vmatpush.xpose.msra.mxu0 0.0
    %296 = vmatpush.xpose.msra.mxu0 0.0
    %297 = vmatpush.xpose.msra.mxu0 0.0
    %298 = vmatpush.xpose.msra.mxu0 0.0
    %299 = vmatpush.xpose.msra.mxu0 0.0
    %300 = vmatpush.xpose.msra.mxu0 0.0
    %301 = vmatpush.xpose.msra.mxu0 0.0
    %302 = vmatpush.xpose.msra.mxu0 0.0
    %303 = vmatpush.xpose.msra.mxu0 0.0
    %304 = vmatpush.xpose.msra.mxu0 0.0
    %305 = vmatpush.xpose.msra.mxu0 0.0
    %306 = vmatpush.xpose.msra.mxu0 0.0
    %307 = vmatpush.xpose.msra.mxu0 0.0
    %308 = vmatpush.xpose.msra.mxu0 0.0
    %309 = vmatpush.xpose.msra.mxu0 %v292
    %310 = vmatmul.f32.gmra.mxu0 %v290
    %v311 = vpop.f32.mrf.mxu0
    %v312 = vadd.f32 %v121, %v311
    %313 = vdwg.mxu0
    %314 = vrot.lane.b32.xlu0 %v92, 96
    %v315 = vpop.permute.xlu0 %314
    %v316 = vsel %vm133, %v78, 0
    %v318 = vsel %vm133, %v315, 0
    %320 = vmatpush.xpose.msra.mxu0 0.0
    %321 = vmatpush.xpose.msra.mxu0 0.0
    %322 = vmatpush.xpose.msra.mxu0 0.0
    %323 = vmatpush.xpose.msra.mxu0 0.0
    %324 = vmatpush.xpose.msra.mxu0 0.0
    %325 = vmatpush.xpose.msra.mxu0 0.0
    %326 = vmatpush.xpose.msra.mxu0 0.0
    %327 = vmatpush.xpose.msra.mxu0 0.0
    %328 = vmatpush.xpose.msra.mxu0 0.0
    %329 = vmatpush.xpose.msra.mxu0 0.0
    %330 = vmatpush.xpose.msra.mxu0 0.0
    %331 = vmatpush.xpose.msra.mxu0 0.0
    %332 = vmatpush.xpose.msra.mxu0 0.0
    %333 = vmatpush.xpose.msra.mxu0 0.0
    %334 = vmatpush.xpose.msra.mxu0 0.0
    %335 = vmatpush.xpose.msra.mxu0 %v318
    %336 = vmatmul.f32.gmra.mxu0 %v316
    %v337 = vpop.f32.mrf.mxu0
    %v338 = vadd.f32 %v122, %v337
    %339 = vdwg.mxu0
    %v340 = vsel %vm133, %v156, -inf
    %341 = vmax.xlane.f32.xlu0 %v340
    %v342 = vpop.xlane.xlu0 %341
    %v343 = vsel %vm133, %v182, -inf
    %344 = vmax.xlane.f32.xlu0 %v343
    %v345 = vpop.xlane.xlu0 %344
    %v346 = vsel %vm133, %v208, -inf
    %347 = vmax.xlane.f32.xlu0 %v346
    %v348 = vpop.xlane.xlu0 %347
    %v349 = vsel %vm133, %v234, -inf
    %350 = vmax.xlane.f32.xlu0 %v349
    %v351 = vpop.xlane.xlu0 %350
    %v352 = vsel %vm133, %v260, -inf
    %353 = vmax.xlane.f32.xlu0 %v352
    %v354 = vpop.xlane.xlu0 %353
    %v355 = vsel %vm133, %v286, -inf
    %356 = vmax.xlane.f32.xlu0 %v355
    %v357 = vpop.xlane.xlu0 %356
    %v358 = vsel %vm133, %v312, -inf
    %359 = vmax.xlane.f32.xlu0 %v358
    %v360 = vpop.xlane.xlu0 %359
    %v361 = vsel %vm133, %v338, -inf
    %362 = vmax.xlane.f32.xlu0 %v361
    %v363 = vpop.xlane.xlu0 %362
    %v364 = vsub.f32 %v156, %v342
    %v365 = vsub.f32 %v182, %v345
    %v366 = vsub.f32 %v208, %v348
    %v367 = vsub.f32 %v234, %v351
    %v368 = vsub.f32 %v260, %v354
    %v369 = vsub.f32 %v286, %v357
    %v370 = vsub.f32 %v312, %v360
    %v371 = vsub.f32 %v338, %v363
    %v372 = vmul.f32 %v364, 1.442695
    %v373 = vpow.pop %v372
    %v374 = vmul.f32 %v365, 1.442695
    %v375 = vpow.pop %v374
    %v376 = vmul.f32 %v366, 1.442695
    %v377 = vpow.pop %v376
    %v378 = vmul.f32 %v367, 1.442695
    %v379 = vpow.pop %v378
    %v380 = vmul.f32 %v368, 1.442695
    %v381 = vpow.pop %v380
    %v382 = vmul.f32 %v369, 1.442695
    %v383 = vpow.pop %v382
    %v384 = vmul.f32 %v370, 1.442695
    %v385 = vpow.pop %v384
    %v386 = vmul.f32 %v371, 1.442695
    %v387 = vpow.pop %v386
    %v388 = vsel %vm133, %v373, 0.0
    %389 = vadd.xlane.f32.xlu0 %v388
    %v390 = vpop.xlane.xlu0 %389
    %v391 = vsel %vm133, %v375, 0.0
    %392 = vadd.xlane.f32.xlu0 %v391
    %v393 = vpop.xlane.xlu0 %392
    %v394 = vsel %vm133, %v377, 0.0
    %395 = vadd.xlane.f32.xlu0 %v394
    %v396 = vpop.xlane.xlu0 %395
    %v397 = vsel %vm133, %v379, 0.0
    %398 = vadd.xlane.f32.xlu0 %v397
    %v399 = vpop.xlane.xlu0 %398
    %v400 = vsel %vm133, %v381, 0.0
    %401 = vadd.xlane.f32.xlu0 %v400
    %v402 = vpop.xlane.xlu0 %401
    %v403 = vsel %vm133, %v383, 0.0
    %404 = vadd.xlane.f32.xlu0 %v403
    %v405 = vpop.xlane.xlu0 %404
    %v406 = vsel %vm133, %v385, 0.0
    %407 = vadd.xlane.f32.xlu0 %v406
    %v408 = vpop.xlane.xlu0 %407
    %v409 = vsel %vm133, %v387, 0.0
    %410 = vadd.xlane.f32.xlu0 %v409
    %v411 = vpop.xlane.xlu0 %410
    %v412 = vrcp.pop %v390
    %v413 = vmul.f32 %v390, %v412
    %v414 = vsub.f32 1.0, %v413
    %v415 = vmul.f32 %v412, %v414
    %v416 = vadd.f32 %v412, %v415
    %vm417 = vweird.f32 %v390
    %vm418 = vweird.f32 %v412
    %vm419 = vmor %vm417, %vm418
    %v420 = vsel %vm419, %v412, %v416
    %v421 = vand.u32 2147483647, %v390
    %vm422 = vcmp.eq.f32.partialorder %v421, 8.507059e+37
    %v423 = vand.u32 %v390, 2147483648
    %v424 = vor.u32 1.1754944e-38, %v423
    %v425 = vsel %vm422, %v424, %v420
    %v426 = vrcp.pop %v393
    %v427 = vmul.f32 %v393, %v426
    %v428 = vsub.f32 1.0, %v427
    %v429 = vmul.f32 %v426, %v428
    %v430 = vadd.f32 %v426, %v429
    %vm431 = vweird.f32 %v393
    %vm432 = vweird.f32 %v426
    %vm433 = vmor %vm431, %vm432
    %v434 = vsel %vm433, %v426, %v430
    %v435 = vand.u32 2147483647, %v393
    %vm436 = vcmp.eq.f32.partialorder %v435, 8.507059e+37
    %v437 = vand.u32 %v393, 2147483648
    %v438 = vor.u32 1.1754944e-38, %v437
    %v439 = vsel %vm436, %v438, %v434
    %v440 = vrcp.pop %v396
    %v441 = vmul.f32 %v396, %v440
    %v442 = vsub.f32 1.0, %v441
    %v443 = vmul.f32 %v440, %v442
    %v444 = vadd.f32 %v440, %v443
    %vm445 = vweird.f32 %v396
    %vm446 = vweird.f32 %v440
    %vm447 = vmor %vm445, %vm446
    %v448 = vsel %vm447, %v440, %v444
    %v449 = vand.u32 2147483647, %v396
    %vm450 = vcmp.eq.f32.partialorder %v449, 8.507059e+37
    %v451 = vand.u32 %v396, 2147483648
    %v452 = vor.u32 1.1754944e-38, %v451
    %v453 = vsel %vm450, %v452, %v448
    %v454 = vrcp.pop %v399
    %v455 = vmul.f32 %v399, %v454
    %v456 = vsub.f32 1.0, %v455
    %v457 = vmul.f32 %v454, %v456
    %v458 = vadd.f32 %v454, %v457
    %vm459 = vweird.f32 %v399
    %vm460 = vweird.f32 %v454
    %vm461 = vmor %vm459, %vm460
    %v462 = vsel %vm461, %v454, %v458
    %v463 = vand.u32 2147483647, %v399
    %vm464 = vcmp.eq.f32.partialorder %v463, 8.507059e+37
    %v465 = vand.u32 %v399, 2147483648
    %v466 = vor.u32 1.1754944e-38, %v465
    %v467 = vsel %vm464, %v466, %v462
    %v468 = vrcp.pop %v402
    %v469 = vmul.f32 %v402, %v468
    %v470 = vsub.f32 1.0, %v469
    %v471 = vmul.f32 %v468, %v470
    %v472 = vadd.f32 %v468, %v471
    %vm473 = vweird.f32 %v402
    %vm474 = vweird.f32 %v468
    %vm475 = vmor %vm473, %vm474
    %v476 = vsel %vm475, %v468, %v472
    %v477 = vand.u32 2147483647, %v402
    %vm478 = vcmp.eq.f32.partialorder %v477, 8.507059e+37
    %v479 = vand.u32 %v402, 2147483648
    %v480 = vor.u32 1.1754944e-38, %v479
    %v481 = vsel %vm478, %v480, %v476
    %v482 = vrcp.pop %v405
    %v483 = vmul.f32 %v405, %v482
    %v484 = vsub.f32 1.0, %v483
    %v485 = vmul.f32 %v482, %v484
    %v486 = vadd.f32 %v482, %v485
    %vm487 = vweird.f32 %v405
    %vm488 = vweird.f32 %v482
    %vm489 = vmor %vm487, %vm488
    %v490 = vsel %vm489, %v482, %v486
    %v491 = vand.u32 2147483647, %v405
    %vm492 = vcmp.eq.f32.partialorder %v491, 8.507059e+37
    %v493 = vand.u32 %v405, 2147483648
    %v494 = vor.u32 1.1754944e-38, %v493
    %v495 = vsel %vm492, %v494, %v490
    %v496 = vrcp.pop %v408
    %v497 = vmul.f32 %v408, %v496
    %v498 = vsub.f32 1.0, %v497
    %v499 = vmul.f32 %v496, %v498
    %v500 = vadd.f32 %v496, %v499
    %vm501 = vweird.f32 %v408
    %vm502 = vweird.f32 %v496
    %vm503 = vmor %vm501, %vm502
    %v504 = vsel %vm503, %v496, %v500
    %v505 = vand.u32 2147483647, %v408
    %vm506 = vcmp.eq.f32.partialorder %v505, 8.507059e+37
    %v507 = vand.u32 %v408, 2147483648
    %v508 = vor.u32 1.1754944e-38, %v507
    %v509 = vsel %vm506, %v508, %v504
    %v510 = vrcp.pop %v411
    %v511 = vmul.f32 %v411, %v510
    %v512 = vsub.f32 1.0, %v511
    %v513 = vmul.f32 %v510, %v512
    %v514 = vadd.f32 %v510, %v513
    %vm515 = vweird.f32 %v411
    %vm516 = vweird.f32 %v510
    %vm517 = vmor %vm515, %vm516
    %v518 = vsel %vm517, %v510, %v514
    %v519 = vand.u32 2147483647, %v411
    %vm520 = vcmp.eq.f32.partialorder %v519, 8.507059e+37
    %v521 = vand.u32 %v411, 2147483648
    %v522 = vor.u32 1.1754944e-38, %v521
    %v523 = vsel %vm520, %v522, %v518
    %v524 = vmul.f32 %v373, %v425
    %v525 = vmul.f32 %v375, %v439
    %v526 = vmul.f32 %v377, %v453
    %v527 = vmul.f32 %v379, %v467
    %v528 = vmul.f32 %v381, %v481
    %v529 = vmul.f32 %v383, %v495
    %v530 = vmul.f32 %v385, %v509
    %v531 = vmul.f32 %v387, %v523
    %532 = vrot.lane.b32.xlu0 %v58, 64
    %v533 = vpop.permute.xlu0 %532
    %v536 = vsel %vm133, %v524, 0
    %538 = vmatpush.msra.mxu0 0.0
    %539 = vmatpush.msra.mxu0 0.0
    %540 = vmatpush.msra.mxu0 0.0
    %541 = vmatpush.msra.mxu0 0.0
    %542 = vmatpush.msra.mxu0 0.0
    %543 = vmatpush.msra.mxu0 0.0
    %544 = vmatpush.msra.mxu0 0.0
    %545 = vmatpush.msra.mxu0 0.0
    %546 = vmatpush.msra.mxu0 0.0
    %547 = vmatpush.msra.mxu0 0.0
    %548 = vmatpush.msra.mxu0 0.0
    %549 = vmatpush.msra.mxu0 0.0
    %550 = vmatpush.msra.mxu0 0.0
    %551 = vmatpush.msra.mxu0 0.0
    %552 = vmatpush.msra.mxu0 0.0
    %553 = vmatpush.msra.mxu0 %v533
    %554 = vmatmul.f32.gmra.mxu0 %v536
    %v555 = vpop.f32.mrf.mxu0
    %v556 = vadd.f32 0.0, %v555
    %557 = vdwg.mxu0
    %558 = vrot.lane.b32.xlu0 %v61, 64
    %v559 = vpop.permute.xlu0 %558
    %v562 = vsel %vm133, %v525, 0
    %564 = vmatpush.msra.mxu0 0.0
    %565 = vmatpush.msra.mxu0 0.0
    %566 = vmatpush.msra.mxu0 0.0
    %567 = vmatpush.msra.mxu0 0.0
    %568 = vmatpush.msra.mxu0 0.0
    %569 = vmatpush.msra.mxu0 0.0
    %570 = vmatpush.msra.mxu0 0.0
    %571 = vmatpush.msra.mxu0 0.0
    %572 = vmatpush.msra.mxu0 0.0
    %573 = vmatpush.msra.mxu0 0.0
    %574 = vmatpush.msra.mxu0 0.0
    %575 = vmatpush.msra.mxu0 0.0
    %576 = vmatpush.msra.mxu0 0.0
    %577 = vmatpush.msra.mxu0 0.0
    %578 = vmatpush.msra.mxu0 0.0
    %579 = vmatpush.msra.mxu0 %v559
    %580 = vmatmul.f32.gmra.mxu0 %v562
    %v581 = vpop.f32.mrf.mxu0
    %v582 = vadd.f32 0.0, %v581
    %583 = vdwg.mxu0
    %584 = vrot.lane.b32.xlu0 %v82, 64
    %v585 = vpop.permute.xlu0 %584
    %v588 = vsel %vm133, %v526, 0
    %590 = vmatpush.msra.mxu0 0.0
    %591 = vmatpush.msra.mxu0 0.0
    %592 = vmatpush.msra.mxu0 0.0
    %593 = vmatpush.msra.mxu0 0.0
    %594 = vmatpush.msra.mxu0 0.0
    %595 = vmatpush.msra.mxu0 0.0
    %596 = vmatpush.msra.mxu0 0.0
    %597 = vmatpush.msra.mxu0 0.0
    %598 = vmatpush.msra.mxu0 0.0
    %599 = vmatpush.msra.mxu0 0.0
    %600 = vmatpush.msra.mxu0 0.0
    %601 = vmatpush.msra.mxu0 0.0
    %602 = vmatpush.msra.mxu0 0.0
    %603 = vmatpush.msra.mxu0 0.0
    %604 = vmatpush.msra.mxu0 0.0
    %605 = vmatpush.msra.mxu0 %v585
    %606 = vmatmul.f32.gmra.mxu0 %v588
    %v607 = vpop.f32.mrf.mxu0
    %v608 = vadd.f32 0.0, %v607
    %609 = vdwg.mxu0
    %610 = vrot.lane.b32.xlu0 %v84, 64
    %v611 = vpop.permute.xlu0 %610
    %v614 = vsel %vm133, %v527, 0
    %616 = vmatpush.msra.mxu0 0.0
    %617 = vmatpush.msra.mxu0 0.0
    %618 = vmatpush.msra.mxu0 0.0
    %619 = vmatpush.msra.mxu0 0.0
    %620 = vmatpush.msra.mxu0 0.0
    %621 = vmatpush.msra.mxu0 0.0
    %622 = vmatpush.msra.mxu0 0.0
    %623 = vmatpush.msra.mxu0 0.0
    %624 = vmatpush.msra.mxu0 0.0
    %625 = vmatpush.msra.mxu0 0.0
    %626 = vmatpush.msra.mxu0 0.0
    %627 = vmatpush.msra.mxu0 0.0
    %628 = vmatpush.msra.mxu0 0.0
    %629 = vmatpush.msra.mxu0 0.0
    %630 = vmatpush.msra.mxu0 0.0
    %631 = vmatpush.msra.mxu0 %v611
    %632 = vmatmul.f32.gmra.mxu0 %v614
    %v633 = vpop.f32.mrf.mxu0
    %v634 = vadd.f32 0.0, %v633
    %635 = vdwg.mxu0
    %636 = vrot.lane.b32.xlu0 %v86, 64
    %v637 = vpop.permute.xlu0 %636
    %v640 = vsel %vm133, %v528, 0
    %642 = vmatpush.msra.mxu0 0.0
    %643 = vmatpush.msra.mxu0 0.0
    %644 = vmatpush.msra.mxu0 0.0
    %645 = vmatpush.msra.mxu0 0.0
    %646 = vmatpush.msra.mxu0 0.0
    %647 = vmatpush.msra.mxu0 0.0
    %648 = vmatpush.msra.mxu0 0.0
    %649 = vmatpush.msra.mxu0 0.0
    %650 = vmatpush.msra.mxu0 0.0
    %651 = vmatpush.msra.mxu0 0.0
    %652 = vmatpush.msra.mxu0 0.0
    %653 = vmatpush.msra.mxu0 0.0
    %654 = vmatpush.msra.mxu0 0.0
    %655 = vmatpush.msra.mxu0 0.0
    %656 = vmatpush.msra.mxu0 0.0
    %657 = vmatpush.msra.mxu0 %v637
    %658 = vmatmul.f32.gmra.mxu0 %v640
    %v659 = vpop.f32.mrf.mxu0
    %v660 = vadd.f32 0.0, %v659
    %661 = vdwg.mxu0
    %662 = vrot.lane.b32.xlu0 %v88, 64
    %v663 = vpop.permute.xlu0 %662
    %v666 = vsel %vm133, %v529, 0
    %668 = vmatpush.msra.mxu0 0.0
    %669 = vmatpush.msra.mxu0 0.0
    %670 = vmatpush.msra.mxu0 0.0
    %671 = vmatpush.msra.mxu0 0.0
    %672 = vmatpush.msra.mxu0 0.0
    %673 = vmatpush.msra.mxu0 0.0
    %674 = vmatpush.msra.mxu0 0.0
    %675 = vmatpush.msra.mxu0 0.0
    %676 = vmatpush.msra.mxu0 0.0
    %677 = vmatpush.msra.mxu0 0.0
    %678 = vmatpush.msra.mxu0 0.0
    %679 = vmatpush.msra.mxu0 0.0
    %680 = vmatpush.msra.mxu0 0.0
    %681 = vmatpush.msra.mxu0 0.0
    %682 = vmatpush.msra.mxu0 0.0
    %683 = vmatpush.msra.mxu0 %v663
    %684 = vmatmul.f32.gmra.mxu0 %v666
    %v685 = vpop.f32.mrf.mxu0
    %v686 = vadd.f32 0.0, %v685
    %687 = vdwg.mxu0
    %688 = vrot.lane.b32.xlu0 %v90, 64
    %v689 = vpop.permute.xlu0 %688
    %v692 = vsel %vm133, %v530, 0
    %694 = vmatpush.msra.mxu0 0.0
    %695 = vmatpush.msra.mxu0 0.0
    %696 = vmatpush.msra.mxu0 0.0
    %697 = vmatpush.msra.mxu0 0.0
    %698 = vmatpush.msra.mxu0 0.0
    %699 = vmatpush.msra.mxu0 0.0
    %700 = vmatpush.msra.mxu0 0.0
    %701 = vmatpush.msra.mxu0 0.0
    %702 = vmatpush.msra.mxu0 0.0
    %703 = vmatpush.msra.mxu0 0.0
    %704 = vmatpush.msra.mxu0 0.0
    %705 = vmatpush.msra.mxu0 0.0
    %706 = vmatpush.msra.mxu0 0.0
    %707 = vmatpush.msra.mxu0 0.0
    %708 = vmatpush.msra.mxu0 0.0
    %709 = vmatpush.msra.mxu0 %v689
    %710 = vmatmul.f32.gmra.mxu0 %v692
    %v711 = vpop.f32.mrf.mxu0
    %v712 = vadd.f32 0.0, %v711
    %713 = vdwg.mxu0
    %714 = vrot.lane.b32.xlu0 %v92, 64
    %v715 = vpop.permute.xlu0 %714
    %v718 = vsel %vm133, %v531, 0
    %720 = vmatpush.msra.mxu0 0.0
    %721 = vmatpush.msra.mxu0 0.0
    %722 = vmatpush.msra.mxu0 0.0
    %723 = vmatpush.msra.mxu0 0.0
    %724 = vmatpush.msra.mxu0 0.0
    %725 = vmatpush.msra.mxu0 0.0
    %726 = vmatpush.msra.mxu0 0.0
    %727 = vmatpush.msra.mxu0 0.0
    %728 = vmatpush.msra.mxu0 0.0
    %729 = vmatpush.msra.mxu0 0.0
    %730 = vmatpush.msra.mxu0 0.0
    %731 = vmatpush.msra.mxu0 0.0
    %732 = vmatpush.msra.mxu0 0.0
    %733 = vmatpush.msra.mxu0 0.0
    %734 = vmatpush.msra.mxu0 0.0
    %735 = vmatpush.msra.mxu0 %v715
    %736 = vmatmul.f32.gmra.mxu0 %v718
    %v737 = vpop.f32.mrf.mxu0
    %v738 = vadd.f32 0.0, %v737
    %739 = vdwg.mxu0
    %742 = vrot.lane.b32.xlu0 %v608, 8
    %v743 = vpop.permute.xlu0 %742
    %744 = vrot.lane.b32.xlu0 %v634, 8
    %v745 = vpop.permute.xlu0 %744
    %750 = vrot.lane.b32.xlu0 %v660, 16
    %v751 = vpop.permute.xlu0 %750
    %752 = vrot.lane.b32.xlu0 %v686, 16
    %v753 = vpop.permute.xlu0 %752
    %758 = vrot.lane.b32.xlu0 %v712, 24
    %v759 = vpop.permute.xlu0 %758
    %760 = vrot.lane.b32.xlu0 %v738, 24
    %v761 = vpop.permute.xlu0 %760
    %v764 = vsel %vm133, %v556, %v743
    %v765 = vsel %vm133, %v582, %v745
    %vm766 = vcmask 130048
    %v767 = vsel %vm766, %v764, %v751
    %v768 = vsel %vm766, %v765, %v753
    %vm769 = vcmask 195584
    %v770 = vsel %vm769, %v767, %v759
    %v771 = vsel %vm769, %v768, %v761
    %v772 = vperm.slane %v31, 1
    %777 = vrot.lane.b32.xlu0 %v23, 32
    %v778 = vpop.permute.xlu0 %777
    %779 = vrot.lane.b32.xlu0 %v25, 32
    %v780 = vpop.permute.xlu0 %779
    %781 = vrot.lane.b32.xlu0 %v27, 32
    %v782 = vpop.permute.xlu0 %781
    %783 = vrot.lane.b32.xlu0 %v29, 32
    %v784 = vpop.permute.xlu0 %783
    %v790 = vsel %vm33, %v770, 0
    %v793 = vsel %vm33, %v771, 0
    %795 = vmatpush.msra.mxu0 0.0
    %796 = vmatpush.msra.mxu0 0.0
    %797 = vmatpush.msra.mxu0 0.0
    %798 = vmatpush.msra.mxu0 0.0
    %799 = vmatpush.msra.mxu0 0.0
    %800 = vmatpush.msra.mxu0 0.0
    %801 = vmatpush.msra.mxu0 0.0
    %802 = vmatpush.msra.mxu0 0.0
    %803 = vmatpush.msra.mxu0 0.0
    %804 = vmatpush.msra.mxu0 0.0
    %805 = vmatpush.msra.mxu0 0.0
    %806 = vmatpush.msra.mxu0 0.0
    %807 = vmatpush.msra.mxu0 %v784
    %808 = vmatpush.msra.mxu0 %v782
    %809 = vmatpush.msra.mxu0 %v780
    %810 = vmatpush.msra.mxu0 %v778
    %811 = vmatmul.f32.gmra.mxu0 %v790
    %v812 = vpop.f32.mrf.mxu0
    %v813 = vadd.f32 %v772, %v812
    %814 = vmatmul.f32.gmra.mxu0 %v793
    %v815 = vpop.f32.mrf.mxu0
    %v816 = vadd.f32 %v772, %v815
    %817 = vdwg.mxu0
    %v818 = vadd.f32 %v21, %v813
    %v819 = vadd.f32 %v22, %v816
    %v820 = vsel %vm33, %v818, 0.0
    %821 = vadd.xlane.f32.xlu0 %v820
    %v822 = vpop.xlane.xlu0 %821
    %v823 = vsel %vm33, %v819, 0.0
    %824 = vadd.xlane.f32.xlu0 %v823
    %v825 = vpop.xlane.xlu0 %824
    %v826 = vrcp.pop 32.0
    %v827 = vmul.f32 32.0, %v826
    %v828 = vsub.f32 1.0, %v827
    %v829 = vmul.f32 %v826, %v828
    %v830 = vadd.f32 %v826, %v829
    %vm831 = vweird.f32 %v826
    %v832 = vsel %vm831, %v826, %v830
    %v833 = vmul.f32 %v822, %v832
    %v834 = vmul.f32 %v825, %v832
    %v835 = vsub.f32 %v818, %v833
    %v836 = vsub.f32 %v819, %v834
    %v837 = vmul.f32 %v835, %v835
    %v838 = vmul.f32 %v836, %v836
    %v839 = vsel %vm33, %v837, 0.0
    %840 = vadd.xlane.f32.xlu0 %v839
    %v841 = vpop.xlane.xlu0 %840
    %v842 = vsel %vm33, %v838, 0.0
    %843 = vadd.xlane.f32.xlu0 %v842
    %v844 = vpop.xlane.xlu0 %843
    %v845 = vmul.f32 %v841, %v832
    %v846 = vmul.f32 %v844, %v832
    %v847 = vadd.f32 %v845, 1e-05
    %v848 = vadd.f32 %v846, 1e-05
    %v849 = vrsqrt.pop %v847
    %v850 = vmul.f32 %v849, %v847
    %v851 = vmul.f32 %v850, %v849
    %v852 = vmul.f32 0.5, %v851
    %v853 = vsub.f32 1.5, %v852
    %v854 = vmul.f32 %v849, %v853
    %vm855 = vweird.f32 %v847
    %vm856 = vweird.f32 %v849
    %vm857 = vmor %vm855, %vm856
    %v858 = vsel %vm857, %v849, %v854
    %v859 = vrsqrt.pop %v848
    %v860 = vmul.f32 %v859, %v848
    %v861 = vmul.f32 %v860, %v859
    %v862 = vmul.f32 0.5, %v861
    %v863 = vsub.f32 1.5, %v862
    %v864 = vmul.f32 %v859, %v863
    %vm865 = vweird.f32 %v848
    %vm866 = vweird.f32 %v859
    %vm867 = vmor %vm865, %vm866
    %v868 = vsel %vm867, %v859, %v864
    %v869 = vmul.f32 %v835, %v858
    %v870 = vmul.f32 %v836, %v868
    %v871 = vperm.slane %v31, 2
    %v872 = vmul.f32 %v869, %v871
    %v873 = vmul.f32 %v870, %v871
    %v874 = vperm.slane %v31, 3
    %v875 = vadd.f32 %v872, %v874
    %v876 = vadd.f32 %v873, %v874
    %v877 = vperm.slane %v31, 4
    %v879 = vsel %vm33, %v875, 0
    %v882 = vsel %vm33, %v876, 0
    %884 = vmatpush.msra.mxu0 0.0
    %885 = vmatpush.msra.mxu0 0.0
    %886 = vmatpush.msra.mxu0 0.0
    %887 = vmatpush.msra.mxu0 0.0
    %888 = vmatpush.msra.mxu0 0.0
    %889 = vmatpush.msra.mxu0 0.0
    %890 = vmatpush.msra.mxu0 0.0
    %891 = vmatpush.msra.mxu0 0.0
    %892 = vmatpush.msra.mxu0 0.0
    %893 = vmatpush.msra.mxu0 0.0
    %894 = vmatpush.msra.mxu0 0.0
    %895 = vmatpush.msra.mxu0 0.0
    %896 = vmatpush.msra.mxu0 %v30
    %897 = vmatpush.msra.mxu0 %v28
    %898 = vmatpush.msra.mxu0 %v26
    %899 = vmatpush.msra.mxu0 %v24
    %900 = vmatmul.f32.gmra.mxu0 %v879
    %v901 = vpop.f32.mrf.mxu0
    %v902 = vadd.f32 %v877, %v901
    %903 = vmatmul.f32.gmra.mxu0 %v882
    %v904 = vpop.f32.mrf.mxu0
    %v905 = vadd.f32 %v877, %v904
    %906 = vdwg.mxu0
    %v907 = vmax.f32 %v902, 0.0
    %v908 = vmax.f32 %v905, 0.0
    %v909 = vld [vmem:[%s3] sm:$0xff]
    %v910 = vld [vmem:[%s3 + $0x8] sm:$0xff]
    %v911 = vld [vmem:[%s3 + $0x10] sm:$0xff]
    %v912 = vld [vmem:[%s3 + $0x18] sm:$0xff]
    %v913 = vld [vmem:[%s3 + $0x20] sm:$0xff]
    %v914 = vld [vmem:[%s3 + $0x28] sm:$0xff]
    %v915 = vld [vmem:[%s3 + $0x30] sm:$0xff]
    %v916 = vld [vmem:[%s3 + $0x38] sm:$0xff]
    %v917 = vperm.slane %v31, 5
    %vm918 = vcmask 523264
    %v920 = vsel %vm918, %v907, 0
    %v923 = vsel %vm918, %v908, 0
    %925 = vmatpush.msra.mxu0 0.0
    %926 = vmatpush.msra.mxu0 0.0
    %927 = vmatpush.msra.mxu0 0.0
    %928 = vmatpush.msra.mxu0 0.0
    %929 = vmatpush.msra.mxu0 0.0
    %930 = vmatpush.msra.mxu0 0.0
    %931 = vmatpush.msra.mxu0 0.0
    %932 = vmatpush.msra.mxu0 0.0
    %933 = vmatpush.msra.mxu0 %v916
    %934 = vmatpush.msra.mxu0 %v915
    %935 = vmatpush.msra.mxu0 %v914
    %936 = vmatpush.msra.mxu0 %v913
    %937 = vmatpush.msra.mxu0 %v912
    %938 = vmatpush.msra.mxu0 %v911
    %939 = vmatpush.msra.mxu0 %v910
    %940 = vmatpush.msra.mxu0 %v909
    %941 = vmatmul.f32.gmra.mxu0 %v920
    %v942 = vpop.f32.mrf.mxu0
    %v943 = vadd.f32 %v917, %v942
    %944 = vmatmul.f32.gmra.mxu0 %v923
    %v945 = vpop.f32.mrf.mxu0
    %v946 = vadd.f32 %v917, %v945
    %947 = vdwg.mxu0
    %v948 = vadd.f32 %v875, %v943
    %v949 = vadd.f32 %v876, %v946
    %v950 = vsel %vm33, %v948, 0.0
    %951 = vadd.xlane.f32.xlu0 %v950
    %v952 = vpop.xlane.xlu0 %951
    %v953 = vsel %vm33, %v949, 0.0
    %954 = vadd.xlane.f32.xlu0 %v953
    %v955 = vpop.xlane.xlu0 %954
    %v956 = vmul.f32 %v952, %v832
    %v957 = vmul.f32 %v955, %v832
    %v958 = vsub.f32 %v948, %v956
    %v959 = vsub.f32 %v949, %v957
    %v960 = vmul.f32 %v958, %v958
    %v961 = vmul.f32 %v959, %v959
    %v962 = vsel %vm33, %v960, 0.0
    %963 = vadd.xlane.f32.xlu0 %v962
    %v964 = vpop.xlane.xlu0 %963
    %v965 = vsel %vm33, %v961, 0.0
    %966 = vadd.xlane.f32.xlu0 %v965
    %v967 = vpop.xlane.xlu0 %966
    %v968 = vmul.f32 %v964, %v832
    %v969 = vmul.f32 %v967, %v832
    %v970 = vadd.f32 %v968, 1e-05
    %v971 = vadd.f32 %v969, 1e-05
    %v972 = vrsqrt.pop %v970
    %v973 = vmul.f32 %v972, %v970
    %v974 = vmul.f32 %v973, %v972
    %v975 = vmul.f32 0.5, %v974
    %v976 = vsub.f32 1.5, %v975
    %v977 = vmul.f32 %v972, %v976
    %vm978 = vweird.f32 %v970
    %vm979 = vweird.f32 %v972
    %vm980 = vmor %vm978, %vm979
    %v981 = vsel %vm980, %v972, %v977
    %v982 = vrsqrt.pop %v971
    %v983 = vmul.f32 %v982, %v971
    %v984 = vmul.f32 %v983, %v982
    %v985 = vmul.f32 0.5, %v984
    %v986 = vsub.f32 1.5, %v985
    %v987 = vmul.f32 %v982, %v986
    %vm988 = vweird.f32 %v971
    %vm989 = vweird.f32 %v982
    %vm990 = vmor %vm988, %vm989
    %v991 = vsel %vm990, %v982, %v987
    %v992 = vmul.f32 %v958, %v981
    %v993 = vmul.f32 %v959, %v991
    %v994 = vperm.slane %v31, 6
    %v995 = vmul.f32 %v992, %v994
    %v996 = vmul.f32 %v993, %v994
    %v997 = vperm.slane %v31, 7
    %v998 = vadd.f32 %v995, %v997
    %v999 = vadd.f32 %v996, %v997
    %1000 = vst.msk [vmem:[#allocation2] sm:$0xff] %vm33, %v998
    %1001 = vst.msk [vmem:[#allocation2 + $0x8] sm:$0xff] %vm33, %v999
    // Predicated region
    $region22: #{tpu_custom_call.1} parent=1 // pred_check
      _
    $region23: #{tpu_custom_call.1} parent=1 // pred_check_branch
      %1003 = sbr.rel (0) target = $region25
    $region24: #{tpu_custom_call.1} parent=1 // pred_region
      %1005 = vsyncadd [#allocation3], 0
      %s1006 = sshll.u32 [#allocation2], 4
      %s1007 = int_to_ptr.vmem [resolvable:$true] %s1006
      %s1008 = sshll.u32 %s5, 4
      %s1009 = int_to_ptr.hbm [resolvable:$true] %s1008
      %1014 = dma.vmem_to_hbm [thread:$0]  %s1007, 256, %s1009, [#allocation3], 128, 128, 8
    $region25: #{tpu_custom_call.1} parent=1 // pred_fallthru
      _
    // Predicated region
    $region26: #{tpu_custom_call.1} parent=1 // pred_check
      _
    $region27: #{tpu_custom_call.1} parent=1 // pred_check_branch
      %1016 = sbr.rel (0) target = $region29
    $region28: #{tpu_custom_call.1} parent=1 // pred_region
      %1018 = dma.done [#allocation3], 256
    $region29: #{tpu_custom_call.1} parent=1 // pred_fallthru
      _
    %1019 = vsyncpa [#allocation3], 1

</llo_original>
